<compile_context>
chip_gen: v5e
topology: v5e:2x2
jax: 0.10.0
libtpu: 0.0.40
codegen_flags: <defaults>
</compile_context>

<pallas_src>
import jax
import jax.numpy as jnp
from jax.experimental import pallas as pl
from jax.experimental.pallas import tpu as pltpu


def gru_kernel(x_ref, h_ref, wx_ref, wh_ref, sx_ref, sh_ref, b_ref,
               out_ref, z_sc, r_sc):
    """One gate per grid step (0: update, 1: reset, 2: memory).

    x_ref  : (B, In)  f32   -- GRU input (resident across steps)
    h_ref  : (B, E)   f32   -- previous state (resident across steps)
    wx_ref : (In, E)  int8  -- this gate's x-side weight columns
    wh_ref : (E, E)   int8  -- this gate's h-side weight columns
    sx_ref : (1, E)   f32   -- per-column dequant scale for wx
    sh_ref : (1, E)   f32   -- per-column dequant scale for wh
    b_ref  : (1, E)   f32   -- pre-summed gate bias
    out    : (B, E)   f32   -- new state (written on the last step only)
    z_sc/r_sc : (B, E) f32 VMEM scratch carrying z / r across steps
    """
    j = pl.program_id(0)

    h = h_ref[...]                                    # f32, used by the blend
    x_bf = x_ref[...].astype(jnp.bfloat16)
    h_bf = h.astype(jnp.bfloat16)

    # int8 values are exactly representable in bf16; per-column scales factor
    # out of the contraction and are applied to the small (B, E) result.
    wx_bf = wx_ref[...].astype(jnp.bfloat16)
    wh_bf = wh_ref[...].astype(jnp.bfloat16)

    # x-side projection of this gate (+ pre-summed bias), shared by all gates.
    pre = (jnp.dot(x_bf, wx_bf, preferred_element_type=jnp.float32)
           * sx_ref[...] + b_ref[...])

    @pl.when(j == 0)
    def _():                                          # update gate
        hdot = (jnp.dot(h_bf, wh_bf, preferred_element_type=jnp.float32)
                * sh_ref[...])
        z_sc[...] = jax.nn.sigmoid(pre + hdot)

    @pl.when(j == 1)
    def _():                                          # reset gate
        hdot = (jnp.dot(h_bf, wh_bf, preferred_element_type=jnp.float32)
                * sh_ref[...])
        r_sc[...] = jax.nn.sigmoid(pre + hdot)

    @pl.when(j == 2)
    def _():                                          # memory + blend
        rh_bf = (r_sc[...] * h).astype(jnp.bfloat16)  # reference ordering: Wmh(r*h)
        mdot = (jnp.dot(rh_bf, wh_bf, preferred_element_type=jnp.float32)
                * sh_ref[...])
        mem = jnp.tanh(pre + mdot)
        z = z_sc[...]
        out_ref[...] = (1.0 - z) * h + z * mem


def _quantize_per_column(w):
    """(K, N) f32 -> (int8 weights, (1, N) f32 per-column scales)."""
    amax = jnp.max(jnp.abs(w), axis=0, keepdims=True)
    scale = jnp.maximum(amax, 1e-8) / 127.0
    q = jnp.clip(jnp.round(w / scale), -127.0, 127.0).astype(jnp.int8)
    return q, scale.astype(jnp.float32)


def pack_gru_params(params):
    """One-time weight packing / quantization (hoisted out of the hot path).

    params: PyTorch-convention weights (out, in) and biases (out,).
    """
    Wux, Wuh = params["update_x_w"], params["update_h_w"]
    Wrx, Wrh = params["reset_x_w"], params["reset_h_w"]
    Wmx, Wmh = params["memory_x_w"], params["memory_h_w"]

    wx = jnp.concatenate([Wux.T, Wrx.T, Wmx.T], axis=1)      # (In, 3E) -- no zero block
    wh = jnp.concatenate([Wuh.T, Wrh.T, Wmh.T], axis=1)      # (E,  3E)

    wx_q, sx = _quantize_per_column(wx)
    wh_q, sh = _quantize_per_column(wh)

    b = jnp.concatenate([
        params["update_x_b"] + params["update_h_b"],
        params["reset_x_b"] + params["reset_h_b"],
        params["memory_x_b"] + params["memory_h_b"],
    ]).reshape(1, -1).astype(jnp.float32)                     # (1, 3E)

    return {"wx_q": wx_q, "sx": sx, "wh_q": wh_q, "sh": sh, "b": b}


def gru_forward(x, state, packed):
    """Single GRU step. `packed` comes from pack_gru_params (call once)."""
    B, E = state.shape
    In = x.shape[1]
    assert E % 128 == 0, "hidden size must be lane-aligned (multiple of 128)"

    return pl.pallas_call(
        gru_kernel,
        out_shape=jax.ShapeDtypeStruct((B, E), jnp.float32),
        grid_spec=pltpu.PrefetchScalarGridSpec(
            num_scalar_prefetch=0,
            grid=(3,),                                         # update, reset, memory
            in_specs=[
                pl.BlockSpec((B, In), lambda j: (0, 0)),       # x (resident)
                pl.BlockSpec((B, E), lambda j: (0, 0)),        # state (resident)
                pl.BlockSpec((In, E), lambda j: (0, j)),       # wx gate block (int8)
                pl.BlockSpec((E, E), lambda j: (0, j)),        # wh gate block (int8)
                pl.BlockSpec((1, E), lambda j: (0, j)),        # sx gate block
                pl.BlockSpec((1, E), lambda j: (0, j)),        # sh gate block
                pl.BlockSpec((1, E), lambda j: (0, j)),        # bias gate block
            ],
            out_specs=pl.BlockSpec((B, E), lambda j: (0, 0)),
            scratch_shapes=[pltpu.VMEM((B, E), jnp.float32),   # z
                            pltpu.VMEM((B, E), jnp.float32)],  # r
        ),
        compiler_params=pltpu.CompilerParams(
            dimension_semantics=("arbitrary",)),               # r -> memory dependency
    )(x, state, packed["wx_q"], packed["wh_q"],
      packed["sx"], packed["sh"], packed["b"])


def init_params(key, input_size, embed_size):
    """Deterministic synthetic parameter init (PyTorch nn.Linear shapes)."""
    names = ["update_x", "update_h", "reset_x", "reset_h", "memory_x", "memory_h"]
    params = {}
    for i, name in enumerate(names):
        in_dim = input_size if name.endswith("_x") else embed_size
        kw, kb = jax.random.split(jax.random.fold_in(key, i))
        scale = 1.0 / jnp.sqrt(in_dim)
        params[name + "_w"] = jax.random.uniform(
            kw, (embed_size, in_dim), jnp.float32, -scale, scale
        )
        params[name + "_b"] = jax.random.uniform(
            kb, (embed_size,), jnp.float32, -scale, scale
        )
    return params


def gru_reference(x, state, params):
    """Pure-JAX f32 reference matching the PyTorch forward exactly."""
    def lin(v, name):
        return v @ params[name + "_w"].T + params[name + "_b"]

    z = jax.nn.sigmoid(lin(x, "update_x") + lin(state, "update_h"))
    r = jax.nn.sigmoid(lin(x, "reset_x") + lin(state, "reset_h"))
    mem = jnp.tanh(lin(x, "memory_x") + lin(r * state, "memory_h"))
    return (1.0 - z) * state + z * mem


if __name__ == "__main__":
    key = jax.random.PRNGKey(0)
    k_x, k_h, k_p = jax.random.split(key, 3)

    batch = 8
    embed_size = 128              # small stand-in for hidden_size=768 (lane-aligned)
    input_size = 3 * embed_size   # att_rnn consumes cat(fuse_feat, h_2, prev_word)

    x = jax.random.normal(k_x, (batch, input_size), jnp.float32)
    state = jax.random.normal(k_h, (batch, embed_size), jnp.float32)
    params = init_params(k_p, input_size, embed_size)

    packed = pack_gru_params(params)   # one-time packing, outside the hot path

    out = jax.block_until_ready(gru_forward(x, state, packed))
    ref = gru_reference(x, state, params)

    assert out.shape == (batch, embed_size)
    max_err = float(jnp.max(jnp.abs(out - ref)))
    # bf16 matmul operands + int8 per-column-scaled weights -> relaxed tolerance.
    assert jnp.allclose(out, ref, atol=5e-2, rtol=5e-2), f"mismatch: max_err={max_err}"

    print("KERNEL_OK")
</pallas_src>

<mosaic_0001>
module attributes {stable_mosaic.version = 11 : i64} {
  func.func @gru_kernel(%arg0: i32, %arg1: memref<8x384xf32, #tpu.memory_space<vmem>>, %arg2: memref<8x128xf32, #tpu.memory_space<vmem>>, %arg3: memref<384x128xi8, #tpu.memory_space<vmem>>, %arg4: memref<128x128xi8, #tpu.memory_space<vmem>>, %arg5: memref<1x128xf32, #tpu.memory_space<vmem>>, %arg6: memref<1x128xf32, #tpu.memory_space<vmem>>, %arg7: memref<1x128xf32, #tpu.memory_space<vmem>>, %arg8: memref<8x128xf32, #tpu.memory_space<vmem>>, %arg9: memref<8x128xf32, #tpu.memory_space<vmem>>, %arg10: memref<8x128xf32, #tpu.memory_space<vmem>>) attributes {dimension_semantics = [#tpu.dimension_semantics<arbitrary>], iteration_bounds = array<i64: 3>, scalar_prefetch = 0 : i64, scratch_operands = 2 : i64, tpu.core_type = #tpu.core_type<tc>, window_params = [{pipeline_mode = #tpu.pipeline_mode<synchronous>, transform_indices = @transform_0, window_bounds = array<i64: 8, 384>}, {pipeline_mode = #tpu.pipeline_mode<synchronous>, transform_indices = @transform_1, window_bounds = array<i64: 8, 128>}, {transform_indices = @transform_2, window_bounds = array<i64: 384, 128>}, {transform_indices = @transform_3, window_bounds = array<i64: 128, 128>}, {transform_indices = @transform_4, window_bounds = array<i64: 1, 128>}, {transform_indices = @transform_5, window_bounds = array<i64: 1, 128>}, {transform_indices = @transform_6, window_bounds = array<i64: 1, 128>}, {pipeline_mode = #tpu.pipeline_mode<synchronous>, transform_indices = @transform_7, window_bounds = array<i64: 8, 128>}]} {
    %c0 = arith.constant 0 : index
    %c0_0 = arith.constant 0 : index
    %0 = vector.load %arg2[%c0, %c0_0] : memref<8x128xf32, #tpu.memory_space<vmem>>, vector<8x128xf32>
    %c0_1 = arith.constant 0 : index
    %c0_2 = arith.constant 0 : index
    %1 = vector.load %arg1[%c0_1, %c0_2] : memref<8x384xf32, #tpu.memory_space<vmem>>, vector<8x384xf32>
    %2 = arith.truncf %1 : vector<8x384xf32> to vector<8x384xbf16>
    %3 = arith.truncf %0 : vector<8x128xf32> to vector<8x128xbf16>
    %c0_3 = arith.constant 0 : index
    %c0_4 = arith.constant 0 : index
    %4 = vector.load %arg3[%c0_3, %c0_4] : memref<384x128xi8, #tpu.memory_space<vmem>>, vector<384x128xi8>
    %5 = arith.sitofp %4 : vector<384x128xi8> to vector<384x128xbf16>
    %c0_5 = arith.constant 0 : index
    %c0_6 = arith.constant 0 : index
    %6 = vector.load %arg4[%c0_5, %c0_6] : memref<128x128xi8, #tpu.memory_space<vmem>>, vector<128x128xi8>
    %7 = arith.sitofp %6 : vector<128x128xi8> to vector<128x128xbf16>
    %cst = arith.constant dense<0.000000e+00> : vector<8x128xf32>
    %8 = tpu.matmul %2, %5, %cst {dimension_numbers = #tpu.dot_dimension_numbers<[1], [0], [0], [1], [0, 0, 1, 1], [], []>} : vector<8x384xbf16>, vector<384x128xbf16>, vector<8x128xf32> -> vector<8x128xf32>
    %c0_7 = arith.constant 0 : index
    %c0_8 = arith.constant 0 : index
    %9 = vector.load %arg5[%c0_7, %c0_8] : memref<1x128xf32, #tpu.memory_space<vmem>>, vector<1x128xf32>
    %10 = vector.broadcast %9 : vector<1x128xf32> to vector<8x128xf32>
    %11 = arith.mulf %8, %10 : vector<8x128xf32>
    %c0_9 = arith.constant 0 : index
    %c0_10 = arith.constant 0 : index
    %12 = vector.load %arg7[%c0_9, %c0_10] : memref<1x128xf32, #tpu.memory_space<vmem>>, vector<1x128xf32>
    %13 = vector.broadcast %12 : vector<1x128xf32> to vector<8x128xf32>
    %14 = arith.addf %11, %13 : vector<8x128xf32>
    %c0_i32 = arith.constant 0 : i32
    %15 = arith.cmpi eq, %arg0, %c0_i32 : i32
    %16 = arith.extui %15 : i1 to i32
    %c0_i32_11 = arith.constant 0 : i32
    %17 = arith.cmpi ne, %16, %c0_i32_11 : i32
    scf.if %17 {
      %cst_14 = arith.constant dense<0.000000e+00> : vector<8x128xf32>
      %24 = tpu.matmul %3, %7, %cst_14 {dimension_numbers = #tpu.dot_dimension_numbers<[1], [0], [0], [1], [0, 0, 1, 1], [], []>} : vector<8x128xbf16>, vector<128x128xbf16>, vector<8x128xf32> -> vector<8x128xf32>
      %c0_15 = arith.constant 0 : index
      %c0_16 = arith.constant 0 : index
      %25 = vector.load %arg6[%c0_15, %c0_16] : memref<1x128xf32, #tpu.memory_space<vmem>>, vector<1x128xf32>
      %26 = vector.broadcast %25 : vector<1x128xf32> to vector<8x128xf32>
      %27 = arith.mulf %24, %26 : vector<8x128xf32>
      %28 = arith.addf %14, %27 : vector<8x128xf32>
      %29 = arith.negf %28 : vector<8x128xf32>
      %30 = math.exp %29 : vector<8x128xf32>
      %cst_17 = arith.constant 1.000000e+00 : f32
      %31 = vector.broadcast %cst_17 : f32 to vector<8x128xf32>
      %32 = arith.addf %31, %30 : vector<8x128xf32>
      %33 = arith.divf %31, %32 : vector<8x128xf32>
      %c0_18 = arith.constant 0 : index
      %c0_19 = arith.constant 0 : index
      %34 = vector.load %arg9[%c0_18, %c0_19] : memref<8x128xf32, #tpu.memory_space<vmem>>, vector<8x128xf32>
      tpu.vector_store %arg9[%c0_18, %c0_19], %33 {strides = array<i32>} : memref<8x128xf32, #tpu.memory_space<vmem>>, vector<8x128xf32>,
    } else {
    }
    %c1_i32 = arith.constant 1 : i32
    %18 = arith.cmpi eq, %arg0, %c1_i32 : i32
    %19 = arith.extui %18 : i1 to i32
    %c0_i32_12 = arith.constant 0 : i32
    %20 = arith.cmpi ne, %19, %c0_i32_12 : i32
    scf.if %20 {
      %cst_14 = arith.constant dense<0.000000e+00> : vector<8x128xf32>
      %24 = tpu.matmul %3, %7, %cst_14 {dimension_numbers = #tpu.dot_dimension_numbers<[1], [0], [0], [1], [0, 0, 1, 1], [], []>} : vector<8x128xbf16>, vector<128x128xbf16>, vector<8x128xf32> -> vector<8x128xf32>
      %c0_15 = arith.constant 0 : index
      %c0_16 = arith.constant 0 : index
      %25 = vector.load %arg6[%c0_15, %c0_16] : memref<1x128xf32, #tpu.memory_space<vmem>>, vector<1x128xf32>
      %26 = vector.broadcast %25 : vector<1x128xf32> to vector<8x128xf32>
      %27 = arith.mulf %24, %26 : vector<8x128xf32>
      %28 = arith.addf %14, %27 : vector<8x128xf32>
      %29 = arith.negf %28 : vector<8x128xf32>
      %30 = math.exp %29 : vector<8x128xf32>
      %cst_17 = arith.constant 1.000000e+00 : f32
      %31 = vector.broadcast %cst_17 : f32 to vector<8x128xf32>
      %32 = arith.addf %31, %30 : vector<8x128xf32>
      %33 = arith.divf %31, %32 : vector<8x128xf32>
      %c0_18 = arith.constant 0 : index
      %c0_19 = arith.constant 0 : index
      %34 = vector.load %arg10[%c0_18, %c0_19] : memref<8x128xf32, #tpu.memory_space<vmem>>, vector<8x128xf32>
      tpu.vector_store %arg10[%c0_18, %c0_19], %33 {strides = array<i32>} : memref<8x128xf32, #tpu.memory_space<vmem>>, vector<8x128xf32>,
    } else {
    }
    %c2_i32 = arith.constant 2 : i32
    %21 = arith.cmpi eq, %arg0, %c2_i32 : i32
    %22 = arith.extui %21 : i1 to i32
    %c0_i32_13 = arith.constant 0 : i32
    %23 = arith.cmpi ne, %22, %c0_i32_13 : i32
    scf.if %23 {
      %c0_14 = arith.constant 0 : index
      %c0_15 = arith.constant 0 : index
      %24 = vector.load %arg10[%c0_14, %c0_15] : memref<8x128xf32, #tpu.memory_space<vmem>>, vector<8x128xf32>
      %25 = arith.mulf %24, %0 : vector<8x128xf32>
      %26 = arith.truncf %25 : vector<8x128xf32> to vector<8x128xbf16>
      %cst_16 = arith.constant dense<0.000000e+00> : vector<8x128xf32>
      %27 = tpu.matmul %26, %7, %cst_16 {dimension_numbers = #tpu.dot_dimension_numbers<[1], [0], [0], [1], [0, 0, 1, 1], [], []>} : vector<8x128xbf16>, vector<128x128xbf16>, vector<8x128xf32> -> vector<8x128xf32>
      %c0_17 = arith.constant 0 : index
      %c0_18 = arith.constant 0 : index
      %28 = vector.load %arg6[%c0_17, %c0_18] : memref<1x128xf32, #tpu.memory_space<vmem>>, vector<1x128xf32>
      %29 = vector.broadcast %28 : vector<1x128xf32> to vector<8x128xf32>
      %30 = arith.mulf %27, %29 : vector<8x128xf32>
      %31 = arith.addf %14, %30 : vector<8x128xf32>
      %32 = math.tanh %31 : vector<8x128xf32>
      %c0_19 = arith.constant 0 : index
      %c0_20 = arith.constant 0 : index
      %33 = vector.load %arg9[%c0_19, %c0_20] : memref<8x128xf32, #tpu.memory_space<vmem>>, vector<8x128xf32>
      %cst_21 = arith.constant 1.000000e+00 : f32
      %34 = vector.broadcast %cst_21 : f32 to vector<8x128xf32>
      %35 = arith.subf %34, %33 : vector<8x128xf32>
      %36 = arith.mulf %35, %0 : vector<8x128xf32>
      %37 = arith.mulf %33, %32 : vector<8x128xf32>
      %38 = arith.addf %36, %37 : vector<8x128xf32>
      %c0_22 = arith.constant 0 : index
      %c0_23 = arith.constant 0 : index
      %39 = vector.load %arg8[%c0_22, %c0_23] : memref<8x128xf32, #tpu.memory_space<vmem>>, vector<8x128xf32>
      tpu.vector_store %arg8[%c0_22, %c0_23], %38 {strides = array<i32>} : memref<8x128xf32, #tpu.memory_space<vmem>>, vector<8x128xf32>,
    } else {
    }
    return
  }
  func.func @transform_0(%arg0: i32) -> (i32, i32) {
    %c0_i32 = arith.constant 0 : i32
    %c0_i32_0 = arith.constant 0 : i32
    %c0_i32_1 = arith.constant 0 : i32
    return %c0_i32, %c0_i32_0 : i32, i32
  }
  func.func @transform_1(%arg0: i32) -> (i32, i32) {
    %c0_i32 = arith.constant 0 : i32
    %c0_i32_0 = arith.constant 0 : i32
    %c0_i32_1 = arith.constant 0 : i32
    return %c0_i32, %c0_i32_0 : i32, i32
  }
  func.func @transform_2(%arg0: i32) -> (i32, i32) {
    %c0_i32 = arith.constant 0 : i32
    %c0_i32_0 = arith.constant 0 : i32
    return %c0_i32, %arg0 : i32, i32
  }
  func.func @transform_3(%arg0: i32) -> (i32, i32) {
    %c0_i32 = arith.constant 0 : i32
    %c0_i32_0 = arith.constant 0 : i32
    return %c0_i32, %arg0 : i32, i32
  }
  func.func @transform_4(%arg0: i32) -> (i32, i32) {
    %c0_i32 = arith.constant 0 : i32
    %c0_i32_0 = arith.constant 0 : i32
    return %c0_i32, %arg0 : i32, i32
  }
  func.func @transform_5(%arg0: i32) -> (i32, i32) {
    %c0_i32 = arith.constant 0 : i32
    %c0_i32_0 = arith.constant 0 : i32
    return %c0_i32, %arg0 : i32, i32
  }
  func.func @transform_6(%arg0: i32) -> (i32, i32) {
    %c0_i32 = arith.constant 0 : i32
    %c0_i32_0 = arith.constant 0 : i32
    return %c0_i32, %arg0 : i32, i32
  }
  func.func @transform_7(%arg0: i32) -> (i32, i32) {
    %c0_i32 = arith.constant 0 : i32
    %c0_i32_0 = arith.constant 0 : i32
    %c0_i32_1 = arith.constant 0 : i32
    return %c0_i32, %c0_i32_0 : i32, i32
  }
}

</mosaic_0001>

<llo_original>
// kernel: tpu_custom_call.1
$region0: #{tpu_custom_call.1}
  #allocation0 [shape = 'u32[]', space=smem, size = 0x4, offset = 0x4, fixed_abs, tag = 'smem constant byte address 0x4 - core index']
  #allocation1 [shape = 'u32[72,128]{1,0:T(1,128)}', space=vmem, size = 0x9000, scoped, tag = 'internal scratch']
  #allocation2 [shape = 'f32[8,128]{1,0:T(8,128)}', space=vmem, size = 0x1000, scoped, tag = 'scratch operand']
  #allocation3 [shape = 'f32[8,128]{1,0:T(8,128)}', space=vmem, size = 0x1000, scoped, tag = 'scratch operand']
  %s0 = inlined_call_operand.hbm [shape: f32[8,384], index: 0, kind: input, shape index: {}]
  %s1 = inlined_call_operand.hbm [shape: f32[8,128], index: 1, kind: input, shape index: {}]
  %s2 = inlined_call_operand.hbm [shape: s8[384,384], index: 2, kind: input, shape index: {}]
  %s3 = inlined_call_operand.hbm [shape: s8[128,384], index: 3, kind: input, shape index: {}]
  %s4 = inlined_call_operand.vmem [shape: f32[1,384], index: 4, kind: input, shape index: {}]
  %s5 = inlined_call_operand.hbm [shape: f32[1,384], index: 5, kind: input, shape index: {}]
  %s6 = inlined_call_operand.hbm [shape: f32[1,384], index: 6, kind: input, shape index: {}]
  %s7 = inlined_call_operand.hbm [shape: f32[8,128], index: 7, kind: output, shape index: {}]
  %s8 = sld [smem:[#allocation0]]
  $region97: #{tpu_custom_call.1} parent=0
    _
  %s10 = ssub.s32 1, %s8
  %s11 = scalar_select 0, %s10, %s8
  $region1: #{tpu_custom_call.1} parent=0
    #allocation4 [shape = 'u8[12288]{0}', space=vmem, size = 0x3000, scoped, tag = 'input window, operand 0, single buffered']
    #allocation5 [shape = 's32[2]{0}', space=sflag, size = 0x8, scoped, tag = 'scoped memory for tpu_custom_call.1']
    #allocation6 [shape = 's32[2]{0}', space=sflag, size = 0x8, scoped, tag = 'scoped memory for tpu_custom_call.1']
    #allocation7 [shape = 'u8[4096]{0}', space=vmem, size = 0x1000, scoped, tag = 'input window, operand 1, single buffered']
    #allocation8 [shape = 's32[1]{0}', space=sflag, size = 0x4, scoped, tag = 'scoped memory for tpu_custom_call.1']
    #allocation9 [shape = 'u8[98304]{0}', space=vmem, size = 0x18000, scoped, tag = 'input window, operand 2']
    #allocation10 [shape = 'u8[32768]{0}', space=vmem, size = 0x8000, scoped, tag = 'input window, operand 3']
    #allocation11 [shape = 'u8[1024]{0}', space=vmem, size = 0x400, scoped, tag = 'input window, operand 5']
    #allocation12 [shape = 'u8[1024]{0}', space=vmem, size = 0x400, scoped, tag = 'input window, operand 6']
    #allocation13 [shape = 'u8[4096]{0}', space=vmem, size = 0x1000, scoped, tag = 'output window, operand 0, single buffered']
    %12 = vsyncpa [#allocation5], 0
    %13 = vsyncpa [#allocation8], 0
    %14 = vsyncpa [#allocation6], 0
    loop: start=0, step=1, limit=5
    $region2: #{tpu_custom_call.1} parent=1 // loop_pre_header
      _
    $region3: #{tpu_custom_call.1} parent=1 // loop_header
      %s16 = sphi 0, %s20
      %p17 = scmp.ge.s32.totalorder %s16, 5
      %s24 = sphi 0, %s24
      %s26 = sphi 0, %s24
      %s27 = sphi 0, %s26
      %s41 = sphi 0, %s27
      %s45 = sphi 0, %s45
      %s47 = sphi 0, %s45
      %s48 = sphi 0, %s47
      %s62 = sphi 0, %s48
      %s68 = sphi 0, %s70
      %s71 = sphi 0, %s68
      %s72 = sphi 0, %s71
      %s88 = sphi 0, %s72
      %s94 = sphi 0, %s96
      %s97 = sphi 0, %s94
      %s98 = sphi 0, %s97
      %s114 = sphi 0, %s98
      %s120 = sphi 0, %s122
      %s123 = sphi 0, %s120
      %s124 = sphi 0, %s123
      %s140 = sphi 0, %s124
      %s146 = sphi 0, %s148
      %s149 = sphi 0, %s146
      %s150 = sphi 0, %s149
      %s166 = sphi 0, %s150
      %s172 = sphi 0, %s174
      %s175 = sphi 0, %s172
      %s176 = sphi 0, %s175
      %s192 = sphi 0, %s176
      %s196 = sphi 0, %s196
      %s198 = sphi 0, %s196
      %s199 = sphi 0, %s198
      %s213 = sphi 0, %s199
    $region4: #{tpu_custom_call.1} parent=1 // loop_header_branch
      %19 = sbr.rel (%p17) target = $region8
    $region5: #{tpu_custom_call.1} parent=1 // loop_body
      %s21 = ssub.s32 %s16, 1
      %s22 = ssub.s32 %s16, 2
      %s23 = sadd.s32 %s16, 1
      %s25 = sadd.s32 %s24, 1
      %p28 = scmp.eq.s32.totalorder %s16, 2
      %p29 = scmp.ne.s32.totalorder %s24, %s26
      %p30 = scmp.eq.s32.totalorder %s16, 0
      %p31 = por %p29, %p30
      %p32 = scmp.ne.s32.totalorder %s24, %s26
      %p33 = scmp.eq.s32.totalorder %s21, 2
      %p34 = por %p32, %p33
      %p35 = scmp.ne.s32.totalorder %s26, %s27
      %p36 = scmp.eq.s32.totalorder %s21, 0
      %p37 = por %p35, %p36
      %p38 = scmp.ne.s32.totalorder %s26, %s27
      %p39 = scmp.eq.s32.totalorder %s22, 2
      %p40 = por %p38, %p39
      %p42 = scmp.ne.s32.totalorder %s27, %s41
      %p43 = scmp.eq.s32.totalorder %s22, 0
      %p44 = por %p42, %p43
      %s46 = sadd.s32 %s45, 1
      %p49 = scmp.eq.s32.totalorder %s16, 2
      %p50 = scmp.ne.s32.totalorder %s45, %s47
      %p51 = scmp.eq.s32.totalorder %s16, 0
      %p52 = por %p50, %p51
      %p53 = scmp.ne.s32.totalorder %s45, %s47
      %p54 = scmp.eq.s32.totalorder %s21, 2
      %p55 = por %p53, %p54
      %p56 = scmp.ne.s32.totalorder %s47, %s48
      %p57 = scmp.eq.s32.totalorder %s21, 0
      %p58 = por %p56, %p57
      %p59 = scmp.ne.s32.totalorder %s47, %s48
      %p60 = scmp.eq.s32.totalorder %s22, 2
      %p61 = por %p59, %p60
      %p63 = scmp.ne.s32.totalorder %s48, %s62
      %p64 = scmp.eq.s32.totalorder %s22, 0
      %p65 = por %p63, %p64
      %s66 = ssub.s32 %s16, %s23
      %p67 = scmp.eq.s32.totalorder %s66, 0
      %s69 = sadd.s32 %s68, 1
      %s70 = scalar_select %p67, %s68, %s69
      %p73 = pneg %p67
      %p74 = scmp.eq.s32.totalorder %s16, 2
      %p75 = por %p73, %p74
      %p76 = scmp.ne.s32.totalorder %s68, %s71
      %p77 = scmp.eq.s32.totalorder %s16, 0
      %p78 = por %p76, %p77
      %p79 = scmp.ne.s32.totalorder %s68, %s71
      %p80 = scmp.eq.s32.totalorder %s21, 2
      %p81 = por %p79, %p80
      %p82 = scmp.ne.s32.totalorder %s71, %s72
      %p83 = scmp.eq.s32.totalorder %s21, 0
      %p84 = por %p82, %p83
      %p85 = scmp.ne.s32.totalorder %s71, %s72
      %p86 = scmp.eq.s32.totalorder %s22, 2
      %p87 = por %p85, %p86
      %p89 = scmp.ne.s32.totalorder %s72, %s88
      %p90 = scmp.eq.s32.totalorder %s22, 0
      %p91 = por %p89, %p90
      %s92 = ssub.s32 %s16, %s23
      %p93 = scmp.eq.s32.totalorder %s92, 0
      %s95 = sadd.s32 %s94, 1
      %s96 = scalar_select %p93, %s94, %s95
      %p99 = pneg %p93
      %p100 = scmp.eq.s32.totalorder %s16, 2
      %p101 = por %p99, %p100
      %p102 = scmp.ne.s32.totalorder %s94, %s97
      %p103 = scmp.eq.s32.totalorder %s16, 0
      %p104 = por %p102, %p103
      %p105 = scmp.ne.s32.totalorder %s94, %s97
      %p106 = scmp.eq.s32.totalorder %s21, 2
      %p107 = por %p105, %p106
      %p108 = scmp.ne.s32.totalorder %s97, %s98
      %p109 = scmp.eq.s32.totalorder %s21, 0
      %p110 = por %p108, %p109
      %p111 = scmp.ne.s32.totalorder %s97, %s98
      %p112 = scmp.eq.s32.totalorder %s22, 2
      %p113 = por %p111, %p112
      %p115 = scmp.ne.s32.totalorder %s98, %s114
      %p116 = scmp.eq.s32.totalorder %s22, 0
      %p117 = por %p115, %p116
      %s118 = ssub.s32 %s16, %s23
      %p119 = scmp.eq.s32.totalorder %s118, 0
      %s121 = sadd.s32 %s120, 1
      %s122 = scalar_select %p119, %s120, %s121
      %p125 = pneg %p119
      %p126 = scmp.eq.s32.totalorder %s16, 2
      %p127 = por %p125, %p126
      %p128 = scmp.ne.s32.totalorder %s120, %s123
      %p129 = scmp.eq.s32.totalorder %s16, 0
      %p130 = por %p128, %p129
      %p131 = scmp.ne.s32.totalorder %s120, %s123
      %p132 = scmp.eq.s32.totalorder %s21, 2
      %p133 = por %p131, %p132
      %p134 = scmp.ne.s32.totalorder %s123, %s124
      %p135 = scmp.eq.s32.totalorder %s21, 0
      %p136 = por %p134, %p135
      %p137 = scmp.ne.s32.totalorder %s123, %s124
      %p138 = scmp.eq.s32.totalorder %s22, 2
      %p139 = por %p137, %p138
      %p141 = scmp.ne.s32.totalorder %s124, %s140
      %p142 = scmp.eq.s32.totalorder %s22, 0
      %p143 = por %p141, %p142
      %s144 = ssub.s32 %s16, %s23
      %p145 = scmp.eq.s32.totalorder %s144, 0
      %s147 = sadd.s32 %s146, 1
      %s148 = scalar_select %p145, %s146, %s147
      %p151 = pneg %p145
      %p152 = scmp.eq.s32.totalorder %s16, 2
      %p153 = por %p151, %p152
      %p154 = scmp.ne.s32.totalorder %s146, %s149
      %p155 = scmp.eq.s32.totalorder %s16, 0
      %p156 = por %p154, %p155
      %p157 = scmp.ne.s32.totalorder %s146, %s149
      %p158 = scmp.eq.s32.totalorder %s21, 2
      %p159 = por %p157, %p158
      %p160 = scmp.ne.s32.totalorder %s149, %s150
      %p161 = scmp.eq.s32.totalorder %s21, 0
      %p162 = por %p160, %p161
      %p163 = scmp.ne.s32.totalorder %s149, %s150
      %p164 = scmp.eq.s32.totalorder %s22, 2
      %p165 = por %p163, %p164
      %p167 = scmp.ne.s32.totalorder %s150, %s166
      %p168 = scmp.eq.s32.totalorder %s22, 0
      %p169 = por %p167, %p168
      %s170 = ssub.s32 %s16, %s23
      %p171 = scmp.eq.s32.totalorder %s170, 0
      %s173 = sadd.s32 %s172, 1
      %s174 = scalar_select %p171, %s172, %s173
      %p177 = pneg %p171
      %p178 = scmp.eq.s32.totalorder %s16, 2
      %p179 = por %p177, %p178
      %p180 = scmp.ne.s32.totalorder %s172, %s175
      %p181 = scmp.eq.s32.totalorder %s16, 0
      %p182 = por %p180, %p181
      %p183 = scmp.ne.s32.totalorder %s172, %s175
      %p184 = scmp.eq.s32.totalorder %s21, 2
      %p185 = por %p183, %p184
      %p186 = scmp.ne.s32.totalorder %s175, %s176
      %p187 = scmp.eq.s32.totalorder %s21, 0
      %p188 = por %p186, %p187
      %p189 = scmp.ne.s32.totalorder %s175, %s176
      %p190 = scmp.eq.s32.totalorder %s22, 2
      %p191 = por %p189, %p190
      %p193 = scmp.ne.s32.totalorder %s176, %s192
      %p194 = scmp.eq.s32.totalorder %s22, 0
      %p195 = por %p193, %p194
      %s197 = sadd.s32 %s196, 1
      %p200 = scmp.eq.s32.totalorder %s16, 2
      %p201 = scmp.ne.s32.totalorder %s196, %s198
      %p202 = scmp.eq.s32.totalorder %s16, 0
      %p203 = por %p201, %p202
      %p204 = scmp.ne.s32.totalorder %s196, %s198
      %p205 = scmp.eq.s32.totalorder %s21, 2
      %p206 = por %p204, %p205
      %p207 = scmp.ne.s32.totalorder %s198, %s199
      %p208 = scmp.eq.s32.totalorder %s21, 0
      %p209 = por %p207, %p208
      %p210 = scmp.ne.s32.totalorder %s198, %s199
      %p211 = scmp.eq.s32.totalorder %s22, 2
      %p212 = por %p210, %p211
      %p214 = scmp.ne.s32.totalorder %s199, %s213
      %p215 = scmp.eq.s32.totalorder %s22, 0
      %p216 = por %p214, %p215
      %p217 = scmp.le.s32.totalorder 1, %s16
      %p218 = scmp.lt.s32.totalorder %s16, 4
      %p219 = pnand %p217, %p218
      %p220 = pneg %p219
      // Predicated region
      $region9: #{tpu_custom_call.1} parent=5 // pred_check
        _
      $region10: #{tpu_custom_call.1} parent=5 // pred_check_branch
        %222 = sbr.rel (%p219) target = $region12
      $region11: #{tpu_custom_call.1} parent=5 // pred_region
        %s223 = ssub.s32 %s16, 1
        // Predicated region
        $region13: #{tpu_custom_call.1} parent=11 // pred_check
          %p224 = pneg %p37
        $region14: #{tpu_custom_call.1} parent=11 // pred_check_branch
          %226 = sbr.rel (%p224) target = $region16
        $region15: #{tpu_custom_call.1} parent=11 // pred_region
          %228 = vsyncadd [#allocation5], 0
          %s230 = sshll.u32 %s0, 4
          %s231 = int_to_ptr.hbm [resolvable:$true] %s230
          %s232 = sshll.u32 [#allocation4], 4
          %s233 = int_to_ptr.vmem [resolvable:$true] %s232
          %235 = dma.hbm_to_vmem [thread:$0]  %s231, 384, %s233, [#allocation5]
        $region16: #{tpu_custom_call.1} parent=11 // pred_fallthru
          _
        // Predicated region
        $region17: #{tpu_custom_call.1} parent=11 // pred_check
          %p236 = pneg %p58
        $region18: #{tpu_custom_call.1} parent=11 // pred_check_branch
          %238 = sbr.rel (%p236) target = $region20
        $region19: #{tpu_custom_call.1} parent=11 // pred_region
          %240 = vsyncadd [#allocation8], 0
          %s242 = sshll.u32 %s1, 4
          %s243 = int_to_ptr.hbm [resolvable:$true] %s242
          %s244 = sshll.u32 [#allocation7], 4
          %s245 = int_to_ptr.vmem [resolvable:$true] %s244
          %247 = dma.hbm_to_vmem [thread:$0]  %s243, 128, %s245, [#allocation8]
        $region20: #{tpu_custom_call.1} parent=11 // pred_fallthru
          _
      $region12: #{tpu_custom_call.1} parent=5 // pred_fallthru
        _
      %p248 = scmp.lt.s32.totalorder %s16, 3
      // Predicated region
      $region21: #{tpu_custom_call.1} parent=5 // pred_check
        %p249 = pneg %p248
      $region22: #{tpu_custom_call.1} parent=5 // pred_check_branch
        %251 = sbr.rel (%p249) target = $region24
      $region23: #{tpu_custom_call.1} parent=5 // pred_region
        // Predicated region
        $region25: #{tpu_custom_call.1} parent=23 // pred_check
          %p252 = pneg %p78
        $region26: #{tpu_custom_call.1} parent=23 // pred_check_branch
          %254 = sbr.rel (%p252) target = $region28
        $region27: #{tpu_custom_call.1} parent=23 // pred_region
          %s255 = sand.u32 %s16, 1
          %s256 = scalar_lea.sflag [#allocation5], %s255
          %s257 = sand.u32 %s68, 1
          %s258 = smul.addr %s257, 96
          %s259 = scalar_lea.vmem [#allocation9], %s258
          %261 = vsyncadd %s256, 0
          %s262 = smul.addr %s16, 8
          %s263 = scalar_lea.hbm %s2, %s262
          %s264 = sshll.u32 %s263, 4
          %s265 = int_to_ptr.hbm [resolvable:$true] %s264
          %s266 = sshll.u32 %s259, 4
          %s267 = int_to_ptr.vmem [resolvable:$true] %s266
          %272 = dma.hbm_to_vmem [thread:$0]  %s265, 1536, %s267, %s256, 384, 128, 8
        $region28: #{tpu_custom_call.1} parent=23 // pred_fallthru
          _
        // Predicated region
        $region29: #{tpu_custom_call.1} parent=23 // pred_check
          %p273 = pneg %p104
        $region30: #{tpu_custom_call.1} parent=23 // pred_check_branch
          %275 = sbr.rel (%p273) target = $region32
        $region31: #{tpu_custom_call.1} parent=23 // pred_region
          %s276 = sand.u32 %s16, 1
          %s277 = scalar_lea.sflag [#allocation5], %s276
          %s278 = sand.u32 %s94, 1
          %s279 = smul.addr %s278, 32
          %s280 = scalar_lea.vmem [#allocation10], %s279
          %282 = vsyncadd %s277, 0
          %s283 = smul.addr %s16, 8
          %s284 = scalar_lea.hbm %s3, %s283
          %s285 = sshll.u32 %s284, 4
          %s286 = int_to_ptr.hbm [resolvable:$true] %s285
          %s287 = sshll.u32 %s280, 4
          %s288 = int_to_ptr.vmem [resolvable:$true] %s287
          %293 = dma.hbm_to_vmem [thread:$0]  %s286, 512, %s288, %s277, 384, 128, 8
        $region32: #{tpu_custom_call.1} parent=23 // pred_fallthru
          _
        // Predicated region
        $region33: #{tpu_custom_call.1} parent=23 // pred_check
          %p294 = pneg %p130
        $region34: #{tpu_custom_call.1} parent=23 // pred_check_branch
          %296 = sbr.rel (%p294) target = $region36
        $region35: #{tpu_custom_call.1} parent=23 // pred_region
          %p297 = scmp.lt.s32.totalorder %s16, 2
          %s298 = scalar_select %p297, %s16, 2
          %s299 = scalar_lea.vmem %s4, %s298
        $region36: #{tpu_custom_call.1} parent=23 // pred_fallthru
          _
        // Predicated region
        $region37: #{tpu_custom_call.1} parent=23 // pred_check
          %p300 = pneg %p156
        $region38: #{tpu_custom_call.1} parent=23 // pred_check_branch
          %302 = sbr.rel (%p300) target = $region40
        $region39: #{tpu_custom_call.1} parent=23 // pred_region
          %s303 = sand.u32 %s16, 1
          %s304 = scalar_lea.sflag [#allocation5], %s303
          %s305 = sand.u32 %s146, 1
          %s306 = scalar_lea.vmem [#allocation11], %s305
          %308 = vsyncadd %s304, 0
          %s309 = scalar_lea.hbm %s5, %s16
          %s311 = sshll.u32 %s309, 4
          %s312 = int_to_ptr.hbm [resolvable:$true] %s311
          %s313 = sshll.u32 %s306, 4
          %s314 = int_to_ptr.vmem [resolvable:$true] %s313
          %316 = dma.hbm_to_vmem [thread:$0]  %s312, 16, %s314, %s304
        $region40: #{tpu_custom_call.1} parent=23 // pred_fallthru
          _
        // Predicated region
        $region41: #{tpu_custom_call.1} parent=23 // pred_check
          %p317 = pneg %p182
        $region42: #{tpu_custom_call.1} parent=23 // pred_check_branch
          %319 = sbr.rel (%p317) target = $region44
        $region43: #{tpu_custom_call.1} parent=23 // pred_region
          %s320 = sand.u32 %s16, 1
          %s321 = scalar_lea.sflag [#allocation5], %s320
          %s322 = sand.u32 %s172, 1
          %s323 = scalar_lea.vmem [#allocation12], %s322
          %325 = vsyncadd %s321, 0
          %s326 = scalar_lea.hbm %s6, %s16
          %s328 = sshll.u32 %s326, 4
          %s329 = int_to_ptr.hbm [resolvable:$true] %s328
          %s330 = sshll.u32 %s323, 4
          %s331 = int_to_ptr.vmem [resolvable:$true] %s330
          %333 = dma.hbm_to_vmem [thread:$0]  %s329, 16, %s331, %s321
        $region44: #{tpu_custom_call.1} parent=23 // pred_fallthru
          _
      $region24: #{tpu_custom_call.1} parent=5 // pred_fallthru
        _
      %p334 = scmp.le.s32.totalorder 1, %s16
      %p335 = scmp.lt.s32.totalorder %s16, 4
      %p336 = pnand %p334, %p335
      %p337 = pneg %p336
      // Predicated region
      $region45: #{tpu_custom_call.1} parent=5 // pred_check
        _
      $region46: #{tpu_custom_call.1} parent=5 // pred_check_branch
        %339 = sbr.rel (%p336) target = $region48
      $region47: #{tpu_custom_call.1} parent=5 // pred_region
        %s340 = ssub.s32 %s16, 1
        // Predicated region
        $region49: #{tpu_custom_call.1} parent=47 // pred_check
          %p341 = pneg %p37
        $region50: #{tpu_custom_call.1} parent=47 // pred_check_branch
          %343 = sbr.rel (%p341) target = $region52
        $region51: #{tpu_custom_call.1} parent=47 // pred_region
          %345 = dma.done [#allocation5], 384
        $region52: #{tpu_custom_call.1} parent=47 // pred_fallthru
          _
        // Predicated region
        $region53: #{tpu_custom_call.1} parent=47 // pred_check
          %p346 = pneg %p58
        $region54: #{tpu_custom_call.1} parent=47 // pred_check_branch
          %348 = sbr.rel (%p346) target = $region56
        $region55: #{tpu_custom_call.1} parent=47 // pred_region
          %350 = dma.done [#allocation8], 128
        $region56: #{tpu_custom_call.1} parent=47 // pred_fallthru
          _
        %s351 = sand.u32 %s21, 1
        %s352 = scalar_lea.sflag [#allocation5], %s351
        %s353 = sand.u32 %s71, 1
        %s354 = smul.addr %s353, 96
        %s355 = scalar_lea.vmem [#allocation9], %s354
        // Predicated region
        $region57: #{tpu_custom_call.1} parent=47 // pred_check
          %p356 = pneg %p84
        $region58: #{tpu_custom_call.1} parent=47 // pred_check_branch
          %358 = sbr.rel (%p356) target = $region60
        $region59: #{tpu_custom_call.1} parent=47 // pred_region
          %360 = dma.done %s352, 1536
        $region60: #{tpu_custom_call.1} parent=47 // pred_fallthru
          _
        %s361 = sand.u32 %s21, 1
        %s362 = scalar_lea.sflag [#allocation5], %s361
        %s363 = sand.u32 %s97, 1
        %s364 = smul.addr %s363, 32
        %s365 = scalar_lea.vmem [#allocation10], %s364
        // Predicated region
        $region61: #{tpu_custom_call.1} parent=47 // pred_check
          %p366 = pneg %p110
        $region62: #{tpu_custom_call.1} parent=47 // pred_check_branch
          %368 = sbr.rel (%p366) target = $region64
        $region63: #{tpu_custom_call.1} parent=47 // pred_region
          %370 = dma.done %s362, 512
        $region64: #{tpu_custom_call.1} parent=47 // pred_fallthru
          _
        %s371 = sand.u32 %s21, 1
        %s372 = scalar_lea.sflag [#allocation5], %s371
        %s373 = sand.u32 %s149, 1
        %s374 = scalar_lea.vmem [#allocation11], %s373
        // Predicated region
        $region65: #{tpu_custom_call.1} parent=47 // pred_check
          %p375 = pneg %p162
        $region66: #{tpu_custom_call.1} parent=47 // pred_check_branch
          %377 = sbr.rel (%p375) target = $region68
        $region67: #{tpu_custom_call.1} parent=47 // pred_region
          %379 = dma.done %s372, 16
        $region68: #{tpu_custom_call.1} parent=47 // pred_fallthru
          _
        %s380 = sand.u32 %s21, 1
        %s381 = scalar_lea.sflag [#allocation5], %s380
        %s382 = sand.u32 %s175, 1
        %s383 = scalar_lea.vmem [#allocation12], %s382
        // Predicated region
        $region69: #{tpu_custom_call.1} parent=47 // pred_check
          %p384 = pneg %p188
        $region70: #{tpu_custom_call.1} parent=47 // pred_check_branch
          %386 = sbr.rel (%p384) target = $region72
        $region71: #{tpu_custom_call.1} parent=47 // pred_region
          %388 = dma.done %s381, 16
        $region72: #{tpu_custom_call.1} parent=47 // pred_fallthru
          _
        %p389 = pneg %p37
        %p390 = pneg %p34
        %p391 = pneg %p58
        %p392 = pneg %p55
        %s393 = sand.u32 %s21, 1
        %s394 = scalar_lea.sflag [#allocation5], %s393
        %s395 = sand.u32 %s71, 1
        %s396 = smul.addr %s395, 96
        %s397 = scalar_lea.vmem [#allocation9], %s396
        %p398 = pneg %p84
        %p399 = pneg %p81
        %s400 = sand.u32 %s21, 1
        %s401 = scalar_lea.sflag [#allocation5], %s400
        %s402 = sand.u32 %s97, 1
        %s403 = smul.addr %s402, 32
        %s404 = scalar_lea.vmem [#allocation10], %s403
        %p405 = pneg %p110
        %p406 = pneg %p107
        %p407 = scmp.lt.s32.totalorder %s21, 2
        %s408 = scalar_select %p407, %s21, 2
        %s409 = scalar_lea.vmem %s4, %s408
        %p410 = pneg %p136
        %p411 = pneg %p133
        %s412 = sand.u32 %s21, 1
        %s413 = scalar_lea.sflag [#allocation5], %s412
        %s414 = sand.u32 %s149, 1
        %s415 = scalar_lea.vmem [#allocation11], %s414
        %p416 = pneg %p162
        %p417 = pneg %p159
        %s418 = sand.u32 %s21, 1
        %s419 = scalar_lea.sflag [#allocation5], %s418
        %s420 = sand.u32 %s175, 1
        %s421 = scalar_lea.vmem [#allocation12], %s420
        %p422 = pneg %p188
        %p423 = pneg %p185
        %p424 = pneg %p209
        %p425 = pneg %p206
        %p426 = scmp.lt.s32.totalorder %s21, 2
        %s427 = scalar_select %p426, %s21, 2
        %s428 = scalar_lea.vmem %s4, %s427
        %v429 = vld [vmem:[#allocation7] sm:$0xff]
        %v430 = vld [vmem:[#allocation4] sm:$0xff]
        %v431 = vld [vmem:[#allocation4 + $0x8] sm:$0xff]
        %v432 = vld [vmem:[#allocation4 + $0x10] sm:$0xff]
        %v433 = vpack.c.bf16 %v430, %v430
        %v434 = vpack.c.bf16 %v431, %v431
        %v435 = vpack.c.bf16 %v432, %v432
        %v436 = vpack.c.bf16 %v429, %v429
        %v437 = vld [vmem:[%s355] sm:$0xff]
        %v438 = vld [vmem:[%s355 + $0x8] sm:$0xff]
        %v439 = vld [vmem:[%s355 + $0x10] sm:$0xff]
        %v440 = vld [vmem:[%s355 + $0x18] sm:$0xff]
        %v441 = vld [vmem:[%s355 + $0x20] sm:$0xff]
        %v442 = vld [vmem:[%s355 + $0x28] sm:$0xff]
        %v443 = vld [vmem:[%s355 + $0x30] sm:$0xff]
        %v444 = vld [vmem:[%s355 + $0x38] sm:$0xff]
        %v445 = vld [vmem:[%s355 + $0x40] sm:$0xff]
        %v446 = vld [vmem:[%s355 + $0x48] sm:$0xff]
        %v447 = vld [vmem:[%s355 + $0x50] sm:$0xff]
        %v448 = vld [vmem:[%s355 + $0x58] sm:$0xff]
        %v449 = vunpack.c.0.s8 %v437
        %v450 = vunpack.c.1.s8 %v437
        %v451 = vunpack.c.2.s8 %v437
        %v452 = vunpack.c.3.s8 %v437
        %v453 = vunpack.c.0.s8 %v438
        %v454 = vunpack.c.1.s8 %v438
        %v455 = vunpack.c.2.s8 %v438
        %v456 = vunpack.c.3.s8 %v438
        %v457 = vunpack.c.0.s8 %v439
        %v458 = vunpack.c.1.s8 %v439
        %v459 = vunpack.c.2.s8 %v439
        %v460 = vunpack.c.3.s8 %v439
        %v461 = vunpack.c.0.s8 %v440
        %v462 = vunpack.c.1.s8 %v440
        %v463 = vunpack.c.2.s8 %v440
        %v464 = vunpack.c.3.s8 %v440
        %v465 = vunpack.c.0.s8 %v441
        %v466 = vunpack.c.1.s8 %v441
        %v467 = vunpack.c.2.s8 %v441
        %v468 = vunpack.c.3.s8 %v441
        %v469 = vunpack.c.0.s8 %v442
        %v470 = vunpack.c.1.s8 %v442
        %v471 = vunpack.c.2.s8 %v442
        %v472 = vunpack.c.3.s8 %v442
        %v473 = vunpack.c.0.s8 %v443
        %v474 = vunpack.c.1.s8 %v443
        %v475 = vunpack.c.2.s8 %v443
        %v476 = vunpack.c.3.s8 %v443
        %v477 = vunpack.c.0.s8 %v444
        %v478 = vunpack.c.1.s8 %v444
        %v479 = vunpack.c.2.s8 %v444
        %v480 = vunpack.c.3.s8 %v444
        %v481 = vunpack.c.0.s8 %v445
        %v482 = vunpack.c.1.s8 %v445
        %v483 = vunpack.c.2.s8 %v445
        %v484 = vunpack.c.3.s8 %v445
        %v485 = vunpack.c.0.s8 %v446
        %v486 = vunpack.c.1.s8 %v446
        %v487 = vunpack.c.2.s8 %v446
        %v488 = vunpack.c.3.s8 %v446
        %v489 = vunpack.c.0.s8 %v447
        %v490 = vunpack.c.1.s8 %v447
        %v491 = vunpack.c.2.s8 %v447
        %v492 = vunpack.c.3.s8 %v447
        %v493 = vunpack.c.0.s8 %v448
        %v494 = vunpack.c.1.s8 %v448
        %v495 = vunpack.c.2.s8 %v448
        %v496 = vunpack.c.3.s8 %v448
        %v497 = vcvt.s32.f32 %v449
        %v498 = vcvt.s32.f32 %v450
        %v499 = vcvt.s32.f32 %v451
        %v500 = vcvt.s32.f32 %v452
        %v501 = vcvt.s32.f32 %v453
        %v502 = vcvt.s32.f32 %v454
        %v503 = vcvt.s32.f32 %v455
        %v504 = vcvt.s32.f32 %v456
        %v505 = vcvt.s32.f32 %v457
        %v506 = vcvt.s32.f32 %v458
        %v507 = vcvt.s32.f32 %v459
        %v508 = vcvt.s32.f32 %v460
        %v509 = vcvt.s32.f32 %v461
        %v510 = vcvt.s32.f32 %v462
        %v511 = vcvt.s32.f32 %v463
        %v512 = vcvt.s32.f32 %v464
        %v513 = vcvt.s32.f32 %v465
        %v514 = vcvt.s32.f32 %v466
        %v515 = vcvt.s32.f32 %v467
        %v516 = vcvt.s32.f32 %v468
        %v517 = vcvt.s32.f32 %v469
        %v518 = vcvt.s32.f32 %v470
        %v519 = vcvt.s32.f32 %v471
        %v520 = vcvt.s32.f32 %v472
        %v521 = vcvt.s32.f32 %v473
        %v522 = vcvt.s32.f32 %v474
        %v523 = vcvt.s32.f32 %v475
        %v524 = vcvt.s32.f32 %v476
        %v525 = vcvt.s32.f32 %v477
        %v526 = vcvt.s32.f32 %v478
        %v527 = vcvt.s32.f32 %v479
        %v528 = vcvt.s32.f32 %v480
        %v529 = vcvt.s32.f32 %v481
        %v530 = vcvt.s32.f32 %v482
        %v531 = vcvt.s32.f32 %v483
        %v532 = vcvt.s32.f32 %v484
        %v533 = vcvt.s32.f32 %v485
        %v534 = vcvt.s32.f32 %v486
        %v535 = vcvt.s32.f32 %v487
        %v536 = vcvt.s32.f32 %v488
        %v537 = vcvt.s32.f32 %v489
        %v538 = vcvt.s32.f32 %v490
        %v539 = vcvt.s32.f32 %v491
        %v540 = vcvt.s32.f32 %v492
        %v541 = vcvt.s32.f32 %v493
        %v542 = vcvt.s32.f32 %v494
        %v543 = vcvt.s32.f32 %v495
        %v544 = vcvt.s32.f32 %v496
        %v545 = vpack.c.bf16 %v498, %v497
        %v546 = vpack.c.bf16 %v500, %v499
        %v547 = vpack.c.bf16 %v502, %v501
        %v548 = vpack.c.bf16 %v504, %v503
        %v549 = vpack.c.bf16 %v506, %v505
        %v550 = vpack.c.bf16 %v508, %v507
        %v551 = vpack.c.bf16 %v510, %v509
        %v552 = vpack.c.bf16 %v512, %v511
        %v553 = vpack.c.bf16 %v514, %v513
        %v554 = vpack.c.bf16 %v516, %v515
        %v555 = vpack.c.bf16 %v518, %v517
        %v556 = vpack.c.bf16 %v520, %v519
        %v557 = vpack.c.bf16 %v522, %v521
        %v558 = vpack.c.bf16 %v524, %v523
        %v559 = vpack.c.bf16 %v526, %v525
        %v560 = vpack.c.bf16 %v528, %v527
        %v561 = vpack.c.bf16 %v530, %v529
        %v562 = vpack.c.bf16 %v532, %v531
        %v563 = vpack.c.bf16 %v534, %v533
        %v564 = vpack.c.bf16 %v536, %v535
        %v565 = vpack.c.bf16 %v538, %v537
        %v566 = vpack.c.bf16 %v540, %v539
        %v567 = vpack.c.bf16 %v542, %v541
        %v568 = vpack.c.bf16 %v544, %v543
        %v569 = vld [vmem:[%s365] sm:$0xff]
        %v570 = vld [vmem:[%s365 + $0x8] sm:$0xff]
        %v571 = vld [vmem:[%s365 + $0x10] sm:$0xff]
        %v572 = vld [vmem:[%s365 + $0x18] sm:$0xff]
        %v573 = vunpack.c.0.s8 %v569
        %v574 = vunpack.c.1.s8 %v569
        %v575 = vunpack.c.2.s8 %v569
        %v576 = vunpack.c.3.s8 %v569
        %v577 = vunpack.c.0.s8 %v570
        %v578 = vunpack.c.1.s8 %v570
        %v579 = vunpack.c.2.s8 %v570
        %v580 = vunpack.c.3.s8 %v570
        %v581 = vunpack.c.0.s8 %v571
        %v582 = vunpack.c.1.s8 %v571
        %v583 = vunpack.c.2.s8 %v571
        %v584 = vunpack.c.3.s8 %v571
        %v585 = vunpack.c.0.s8 %v572
        %v586 = vunpack.c.1.s8 %v572
        %v587 = vunpack.c.2.s8 %v572
        %v588 = vunpack.c.3.s8 %v572
        %v589 = vcvt.s32.f32 %v573
        %v590 = vcvt.s32.f32 %v574
        %v591 = vcvt.s32.f32 %v575
        %v592 = vcvt.s32.f32 %v576
        %v593 = vcvt.s32.f32 %v577
        %v594 = vcvt.s32.f32 %v578
        %v595 = vcvt.s32.f32 %v579
        %v596 = vcvt.s32.f32 %v580
        %v597 = vcvt.s32.f32 %v581
        %v598 = vcvt.s32.f32 %v582
        %v599 = vcvt.s32.f32 %v583
        %v600 = vcvt.s32.f32 %v584
        %v601 = vcvt.s32.f32 %v585
        %v602 = vcvt.s32.f32 %v586
        %v603 = vcvt.s32.f32 %v587
        %v604 = vcvt.s32.f32 %v588
        %v605 = vpack.c.bf16 %v590, %v589
        %v606 = vpack.c.bf16 %v592, %v591
        %v607 = vpack.c.bf16 %v594, %v593
        %v608 = vpack.c.bf16 %v596, %v595
        %v609 = vpack.c.bf16 %v598, %v597
        %v610 = vpack.c.bf16 %v600, %v599
        %v611 = vpack.c.bf16 %v602, %v601
        %v612 = vpack.c.bf16 %v604, %v603
        %613 = vmatpush.bf16.msra.mxu0 %v552
        %614 = vmatpush.bf16.msra.mxu0 %v551
        %615 = vmatpush.bf16.msra.mxu0 %v550
        %616 = vmatpush.bf16.msra.mxu0 %v549
        %617 = vmatpush.bf16.msra.mxu0 %v548
        %618 = vmatpush.bf16.msra.mxu0 %v547
        %619 = vmatpush.bf16.msra.mxu0 %v546
        %620 = vmatpush.bf16.msra.mxu0 %v545
        %621 = vmatmul.bf16.gmra.mxu0 %v433
        %v622 = vpop.f32.mrf.mxu0
        %v623 = vadd.f32 0.0, %v622
        %v624 = vpop.f32.mrf.mxu0
        %625 = vdwg.mxu0
        %626 = vmatpush.bf16.msra.mxu0 %v560
        %627 = vmatpush.bf16.msra.mxu0 %v559
        %628 = vmatpush.bf16.msra.mxu0 %v558
        %629 = vmatpush.bf16.msra.mxu0 %v557
        %630 = vmatpush.bf16.msra.mxu0 %v556
        %631 = vmatpush.bf16.msra.mxu0 %v555
        %632 = vmatpush.bf16.msra.mxu0 %v554
        %633 = vmatpush.bf16.msra.mxu0 %v553
        %634 = vmatmul.bf16.gmra.mxu0 %v434
        %v635 = vpop.f32.mrf.mxu0
        %v636 = vadd.f32 %v623, %v635
        %v637 = vpop.f32.mrf.mxu0
        %638 = vdwg.mxu0
        %639 = vmatpush.bf16.msra.mxu0 %v568
        %640 = vmatpush.bf16.msra.mxu0 %v567
        %641 = vmatpush.bf16.msra.mxu0 %v566
        %642 = vmatpush.bf16.msra.mxu0 %v565
        %643 = vmatpush.bf16.msra.mxu0 %v564
        %644 = vmatpush.bf16.msra.mxu0 %v563
        %645 = vmatpush.bf16.msra.mxu0 %v562
        %646 = vmatpush.bf16.msra.mxu0 %v561
        %647 = vmatmul.bf16.gmra.mxu0 %v435
        %v648 = vpop.f32.mrf.mxu0
        %v649 = vadd.f32 %v636, %v648
        %v650 = vpop.f32.mrf.mxu0
        %651 = vdwg.mxu0
        %v652 = vld [vmem:[%s428] sm:$0x1]
        %v654 = vperm.slane %v652, 0
        %v656 = vmul.f32 %v649, %v654
        %v657 = vld [vmem:[%s383] sm:$0x1]
        %v659 = vperm.slane %v657, 0
        %v661 = vadd.f32 %v656, %v659
        %p662 = scmp.eq.s32.totalorder %s21, 0
        // Predicated region
        $region73: #{tpu_custom_call.1} parent=47 // pred_check
          %p663 = pneg %p662
        $region74: #{tpu_custom_call.1} parent=47 // pred_check_branch
          %665 = sbr.rel (%p663) target = $region76
        $region75: #{tpu_custom_call.1} parent=47 // pred_region
          %666 = vmatpush.bf16.msra.mxu0 %v612
          %667 = vmatpush.bf16.msra.mxu0 %v611
          %668 = vmatpush.bf16.msra.mxu0 %v610
          %669 = vmatpush.bf16.msra.mxu0 %v609
          %670 = vmatpush.bf16.msra.mxu0 %v608
          %671 = vmatpush.bf16.msra.mxu0 %v607
          %672 = vmatpush.bf16.msra.mxu0 %v606
          %673 = vmatpush.bf16.msra.mxu0 %v605
          %674 = vmatmul.bf16.gmra.mxu0 %v436
          %v675 = vpop.f32.mrf.mxu0
          %v676 = vadd.f32 0.0, %v675
          %v677 = vpop.f32.mrf.mxu0
          %678 = vdwg.mxu0
          %v679 = vld [vmem:[%s374] sm:$0x1]
          %v681 = vperm.slane %v679, 0
          %v683 = vmul.f32 %v676, %v681
          %v684 = vadd.f32 %v661, %v683
          %v685 = vxor.u32 %v684, 2147483648
          %v686 = vmul.f32 %v685, 1.442695
          %v687 = vpow.pop %v686
          %v688 = vadd.f32 %v687, 1.0
          %v689 = vrcp.pop %v688
          %v690 = vmul.f32 %v688, %v689
          %v691 = vsub.f32 1.0, %v690
          %v692 = vmul.f32 %v689, %v691
          %v693 = vadd.f32 %v689, %v692
          %vm694 = vweird.f32 %v688
          %vm695 = vweird.f32 %v689
          %vm696 = vmor %vm694, %vm695
          %v697 = vsel %vm696, %v689, %v693
          %v698 = vand.u32 2147483647, %v688
          %vm699 = vcmp.eq.f32.partialorder %v698, 8.507059e+37
          %v700 = vand.u32 %v688, 2147483648
          %v701 = vor.u32 1.1754944e-38, %v700
          %v702 = vsel %vm699, %v701, %v697
          %v703 = vmul.f32 1.0, %v702
          %704 = vst [vmem:[#allocation2] sm:$0xff] %v703
        $region76: #{tpu_custom_call.1} parent=47 // pred_fallthru
          _
        %p705 = scmp.eq.s32.totalorder %s21, 1
        // Predicated region
        $region77: #{tpu_custom_call.1} parent=47 // pred_check
          %p706 = pneg %p705
        $region78: #{tpu_custom_call.1} parent=47 // pred_check_branch
          %708 = sbr.rel (%p706) target = $region80
        $region79: #{tpu_custom_call.1} parent=47 // pred_region
          %709 = vmatpush.bf16.msra.mxu0 %v612
          %710 = vmatpush.bf16.msra.mxu0 %v611
          %711 = vmatpush.bf16.msra.mxu0 %v610
          %712 = vmatpush.bf16.msra.mxu0 %v609
          %713 = vmatpush.bf16.msra.mxu0 %v608
          %714 = vmatpush.bf16.msra.mxu0 %v607
          %715 = vmatpush.bf16.msra.mxu0 %v606
          %716 = vmatpush.bf16.msra.mxu0 %v605
          %717 = vmatmul.bf16.gmra.mxu0 %v436
          %v718 = vpop.f32.mrf.mxu0
          %v719 = vadd.f32 0.0, %v718
          %v720 = vpop.f32.mrf.mxu0
          %721 = vdwg.mxu0
          %v722 = vld [vmem:[%s374] sm:$0x1]
          %v724 = vperm.slane %v722, 0
          %v726 = vmul.f32 %v719, %v724
          %v727 = vadd.f32 %v661, %v726
          %v728 = vxor.u32 %v727, 2147483648
          %v729 = vmul.f32 %v728, 1.442695
          %v730 = vpow.pop %v729
          %v731 = vadd.f32 %v730, 1.0
          %v732 = vrcp.pop %v731
          %v733 = vmul.f32 %v731, %v732
          %v734 = vsub.f32 1.0, %v733
          %v735 = vmul.f32 %v732, %v734
          %v736 = vadd.f32 %v732, %v735
          %vm737 = vweird.f32 %v731
          %vm738 = vweird.f32 %v732
          %vm739 = vmor %vm737, %vm738
          %v740 = vsel %vm739, %v732, %v736
          %v741 = vand.u32 2147483647, %v731
          %vm742 = vcmp.eq.f32.partialorder %v741, 8.507059e+37
          %v743 = vand.u32 %v731, 2147483648
          %v744 = vor.u32 1.1754944e-38, %v743
          %v745 = vsel %vm742, %v744, %v740
          %v746 = vmul.f32 1.0, %v745
          %747 = vst [vmem:[#allocation3] sm:$0xff] %v746
        $region80: #{tpu_custom_call.1} parent=47 // pred_fallthru
          _
        %p748 = scmp.eq.s32.totalorder %s21, 2
        // Predicated region
        $region81: #{tpu_custom_call.1} parent=47 // pred_check
          %p749 = pneg %p748
        $region82: #{tpu_custom_call.1} parent=47 // pred_check_branch
          %751 = sbr.rel (%p749) target = $region84
        $region83: #{tpu_custom_call.1} parent=47 // pred_region
          %v752 = vld [vmem:[#allocation3] sm:$0xff]
          %v753 = vmul.f32 %v752, %v429
          %v754 = vpack.c.bf16 %v753, %v753
          %755 = vmatpush.bf16.msra.mxu0 %v612
          %756 = vmatpush.bf16.msra.mxu0 %v611
          %757 = vmatpush.bf16.msra.mxu0 %v610
          %758 = vmatpush.bf16.msra.mxu0 %v609
          %759 = vmatpush.bf16.msra.mxu0 %v608
          %760 = vmatpush.bf16.msra.mxu0 %v607
          %761 = vmatpush.bf16.msra.mxu0 %v606
          %762 = vmatpush.bf16.msra.mxu0 %v605
          %763 = vmatmul.bf16.gmra.mxu0 %v754
          %v764 = vpop.f32.mrf.mxu0
          %v765 = vadd.f32 0.0, %v764
          %v766 = vpop.f32.mrf.mxu0
          %767 = vdwg.mxu0
          %v768 = vld [vmem:[%s374] sm:$0x1]
          %v770 = vperm.slane %v768, 0
          %v772 = vmul.f32 %v765, %v770
          %v773 = vadd.f32 %v661, %v772
          %v774 = vtanh.pop %v773
          %v775 = vld [vmem:[#allocation2] sm:$0xff]
          %v776 = vsub.f32 1.0, %v775
          %v777 = vmul.f32 %v776, %v429
          %v778 = vmul.f32 %v775, %v774
          %v779 = vadd.f32 %v777, %v778
          %780 = vst [vmem:[#allocation13] sm:$0xff] %v779
        $region84: #{tpu_custom_call.1} parent=47 // pred_fallthru
          _
        // Predicated region
        $region85: #{tpu_custom_call.1} parent=47 // pred_check
          %p781 = pneg %p206
        $region86: #{tpu_custom_call.1} parent=47 // pred_check_branch
          %783 = sbr.rel (%p781) target = $region88
        $region87: #{tpu_custom_call.1} parent=47 // pred_region
          %785 = vsyncadd [#allocation6], 0
          %s787 = sshll.u32 [#allocation13], 4
          %s788 = int_to_ptr.vmem [resolvable:$true] %s787
          %s789 = sshll.u32 %s7, 4
          %s790 = int_to_ptr.hbm [resolvable:$true] %s789
          %792 = dma.vmem_to_hbm [thread:$0]  %s788, 128, %s790, [#allocation6]
        $region88: #{tpu_custom_call.1} parent=47 // pred_fallthru
          _
        // Predicated region
        $region89: #{tpu_custom_call.1} parent=47 // pred_check
          %p793 = pneg %p206
        $region90: #{tpu_custom_call.1} parent=47 // pred_check_branch
          %795 = sbr.rel (%p793) target = $region92
        $region91: #{tpu_custom_call.1} parent=47 // pred_region
          %797 = dma.done [#allocation6], 128
        $region92: #{tpu_custom_call.1} parent=47 // pred_fallthru
          _
      $region48: #{tpu_custom_call.1} parent=5 // pred_fallthru
        _
      %p798 = scmp.le.s32.totalorder 2, %s16
      // Predicated region
      $region93: #{tpu_custom_call.1} parent=5 // pred_check
        %p799 = pneg %p798
      $region94: #{tpu_custom_call.1} parent=5 // pred_check_branch
        %801 = sbr.rel (%p799) target = $region96
      $region95: #{tpu_custom_call.1} parent=5 // pred_region
        %s802 = ssub.s32 %s16, 2
      $region96: #{tpu_custom_call.1} parent=5 // pred_fallthru
        _
    $region6: #{tpu_custom_call.1} parent=1 // loop_footer
      %s20 = sadd.s32 1, %s16
    $region7: #{tpu_custom_call.1} parent=1 // loop_footer_branch
      %15 = sbr.rel target = $region3
    $region8: #{tpu_custom_call.1} parent=1 // loop_exit
      _
    %803 = vsyncpa [#allocation5], 1
    %s804 = scalar_lea.sflag [#allocation5], 1
    %805 = vsyncpa %s804, 1
    %806 = vsyncpa [#allocation8], 1
    %807 = vsyncpa [#allocation6], 1
    %s808 = scalar_lea.sflag [#allocation6], 1
    %809 = vsyncpa %s808, 1

</llo_original>
